<compile_context>
chip_gen: v6e
topology: v6e:2x2x1
jax: 0.10.0
libtpu: 0.0.40
codegen_flags: <defaults>
</compile_context>

<pallas_src>
import jax
import jax.numpy as jnp
from jax.experimental import pallas as pl
from jax.experimental.pallas import tpu as pltpu

# ---------------- configuration (opts) ----------------
BOARD = 6                   # 6x6 battleship board
BOARD_EMB_DIM = 5           # 'binary' -> eye(5)
POS_EMB_SIZE = 8
CHANNEL = 16
ENCODE_SIZE = 32
DROPOUT = 0.0               # TODO(synk): dropout is identity here (eval / p=0)
C_IN = BOARD_EMB_DIM + POS_EMB_SIZE     # 13
N_POS = BOARD * BOARD                   # 36
K_FULL = C_IN * 25                      # 325 (5x5 window, all channels)
K_OH = BOARD_EMB_DIM * 25               # 125 (one-hot channels only)
K_PAD = 128                             # one-hot K padded to one lane group
N_FEATS = 3 * CHANNEL                   # 48 (concat of the three conv branches)


def _round_up(x, m):
    return (x + m - 1) // m * m


# ---------------- Pallas kernel (hot path) ----------------
def cnn_encoder_kernel(p_ref, w_ref, bias_ref, wl_ref, bl_ref, out_ref):
    # conv1x1 + conv3x3 + conv5x5 over the one-hot channels, fused as ONE MXU
    # matmul (bf16 inputs, f32 accumulation).
    h = jnp.dot(p_ref[...], w_ref[...], preferred_element_type=jnp.float32)
    # Per-position bias = pos-emb conv contribution + conv biases (exact f32),
    # then ReLU.
    h = jnp.maximum(h + bias_ref[...], 0.0)
    # Output Linear: bf16 operands on the native MXU path, f32 acc + f32 bias.
    out_ref[...] = (
        jnp.dot(h.astype(jnp.bfloat16), wl_ref[...],
                preferred_element_type=jnp.float32)
        + bl_ref[...])


def run_encoder_kernel(p_oh, w_oh, bias_tile, wl_t, bl, *, tile_b):
    rows = p_oh.shape[0]
    m_t = tile_b * N_POS                      # rows per grid step
    assert rows % m_t == 0 and m_t % 8 == 0
    grid = (rows // m_t,)

    out = pl.pallas_call(
        cnn_encoder_kernel,
        out_shape=jax.ShapeDtypeStruct((rows, ENCODE_SIZE), jnp.float32),
        grid_spec=pltpu.PrefetchScalarGridSpec(
            num_scalar_prefetch=0,
            grid=grid,
            in_specs=[
                pl.BlockSpec((m_t, K_PAD), lambda i: (i, 0)),             # patches
                pl.BlockSpec((K_PAD, N_FEATS), lambda i: (0, 0)),         # W (one-hot rows)
                pl.BlockSpec((m_t, N_FEATS), lambda i: (0, 0)),           # pos+conv bias (resident)
                pl.BlockSpec((N_FEATS, ENCODE_SIZE), lambda i: (0, 0)),   # W_lin^T
                pl.BlockSpec((1, ENCODE_SIZE), lambda i: (0, 0)),         # b_lin
            ],
            out_specs=pl.BlockSpec((m_t, ENCODE_SIZE), lambda i: (i, 0)),
        ),
        compiler_params=pltpu.CompilerParams(
            dimension_semantics=("parallel",)),   # v7x: shard rows over 2 TCs
    )(p_oh, w_oh, bias_tile, wl_t, bl)
    return out


# ---------------- glue: embeddings + im2col (indexing only) ----------------
def im2col5(x):
    """x: (B, C, 6, 6) -> (B*36, C*25), pad=2, inner order (C, kh, kw)."""
    B, C, H, W = x.shape
    xp = jnp.pad(x, ((0, 0), (0, 0), (2, 2), (2, 2)))
    patches = []
    for kh in range(5):
        for kw in range(5):
            patches.append(xp[:, :, kh:kh + H, kw:kw + W])    # (B, C, H, W)
    p = jnp.stack(patches, axis=2)                            # (B, C, 25, H, W)
    p = jnp.transpose(p, (0, 3, 4, 1, 2)).reshape(B * H * W, C * 25)
    return p


def board_onehot_nchw(board, board_emb_table):
    """board: (B, 1, 6, 6) int in [1,5] -> (B, 5, 6, 6)."""
    one_hot = board_emb_table[board - 1]                      # (B,1,6,6,E)
    return jnp.transpose(one_hot, (0, 4, 2, 3, 1))[..., 0]    # (B,E,6,6)


def pos_nchw(pos_emb_table):
    """(36, P) -> (1, P, 6, 6), matching torch's transpose(0,1).view(1,-1,6,6)."""
    return pos_emb_table.T.reshape(1, POS_EMB_SIZE, BOARD, BOARD)


def build_inputs_nchw(board, board_emb_table, pos_emb_table):
    """(B,1,6,6) int -> (B, 13, 6, 6) f32 (used by the pure-JAX reference)."""
    B = board.shape[0]
    emb = board_onehot_nchw(board, board_emb_table).astype(jnp.float32)
    pos = jnp.broadcast_to(pos_nchw(pos_emb_table),
                           (B, POS_EMB_SIZE, BOARD, BOARD))
    return jnp.concatenate([emb, pos], axis=1)


def build_combined_weights(params):
    """Scatter w1 (centre tap) and w3 (inner 3x3 taps) into the 5x5 tap grid,
    concat with w5 -> (325, 48) matching im2col's (C, kh, kw) order and the
    PyTorch concat order [conv1x1, conv3x3, conv5x5].  Split into one-hot rows
    (streamed) and pos rows (folded into a bias)."""
    w1f = jnp.pad(params['w1'], ((0, 0), (0, 0), (2, 2), (2, 2))) \
        .reshape(CHANNEL, K_FULL).T
    w3f = jnp.pad(params['w3'], ((0, 0), (0, 0), (1, 1), (1, 1))) \
        .reshape(CHANNEL, K_FULL).T
    w5f = params['w5'].reshape(CHANNEL, K_FULL).T
    w_comb = jnp.concatenate([w1f, w3f, w5f], axis=1)         # (325, 48)
    b_comb = jnp.concatenate([params['b1'], params['b3'], params['b5']])  # (48,)
    w_oh = w_comb[:K_OH]                                      # (125, 48) one-hot rows
    w_pos = w_comb[K_OH:]                                     # (200, 48) pos rows
    return w_oh, w_pos, b_comb


def cnn_encoder_forward(board, params, *, tile_b=128):
    """board: (B, 1, 6, 6) int in [1,5] -> (B, 36, ENCODE_SIZE) f32."""
    B = board.shape[0]
    tile_b = min(tile_b, _round_up(B, 2))         # tile_b even => rows%8==0
    B_pad = _round_up(B, tile_b)
    if B_pad != B:
        # Pad the tiny board batch BEFORE im2col (value 1 is a valid token),
        # instead of padding the 25x-blown-up patch matrix in HBM.
        board = jnp.pad(board, ((0, B_pad - B), (0, 0), (0, 0), (0, 0)),
                        constant_values=1)

    # One-hot patches: values are exactly 0/1, so bf16 is lossless here.
    emb = board_onehot_nchw(board, params['board_emb']).astype(jnp.bfloat16)
    p_oh = im2col5(emb)                                       # (B_pad*36, 125)
    p_oh = jnp.pad(p_oh, ((0, 0), (0, K_PAD - K_OH)))         # (B_pad*36, 128)

    w_oh, w_pos, b_comb = build_combined_weights(params)
    w_oh = jnp.pad(w_oh, ((0, K_PAD - K_OH), (0, 0))).astype(jnp.bfloat16)

    # Fold the batch-invariant pos-emb conv contribution (+ conv biases) into a
    # per-position bias, computed once in f32.
    pos_patch = im2col5(pos_nchw(params['pos_emb']).astype(jnp.float32))  # (36, 200)
    bias_pos = pos_patch @ w_pos + b_comb[None, :]            # (36, 48) f32
    bias_tile = jnp.tile(bias_pos, (tile_b, 1))               # (tile_b*36, 48)

    out = run_encoder_kernel(
        p_oh, w_oh, bias_tile,
        params['wl'].T.astype(jnp.bfloat16),                  # (48, 32) bf16
        params['bl'].reshape(1, -1),                          # (1, 32) f32
        tile_b=tile_b)
    return out.reshape(B_pad, N_POS, ENCODE_SIZE)[:B]


# ---------------- pure-JAX reference (lax.conv, f32) for verification -------
def reference_forward(board, params):
    x = build_inputs_nchw(board, params['board_emb'], params['pos_emb'])
    B = x.shape[0]

    def conv(x, w, b, pad):
        y = jax.lax.conv_general_dilated(
            x, w, (1, 1), [(pad, pad), (pad, pad)],
            dimension_numbers=('NCHW', 'OIHW', 'NCHW'))
        return jnp.maximum(y + b[None, :, None, None], 0.0)

    x1 = conv(x, params['w1'], params['b1'], 0)
    x2 = conv(x, params['w3'], params['b3'], 1)
    x3 = conv(x, params['w5'], params['b5'], 2)
    feats = jnp.concatenate(
        [v.reshape(B, CHANNEL, N_POS) for v in (x1, x2, x3)], axis=1)
    feats = jnp.transpose(feats, (0, 2, 1))                   # (B, 36, 3C)
    return feats @ params['wl'].T + params['bl']


# ---------------- deterministic parameter init ----------------
def xavier_normal(key, shape, fan_in, fan_out):
    std = (2.0 / (fan_in + fan_out)) ** 0.5
    return std * jax.random.normal(key, shape, dtype=jnp.float32)


def init_params(key):
    ks = jax.random.split(key, 8)
    w1 = xavier_normal(ks[0], (CHANNEL, C_IN, 1, 1), C_IN * 1, CHANNEL * 1)
    w3 = xavier_normal(ks[1], (CHANNEL, C_IN, 3, 3), C_IN * 9, CHANNEL * 9)
    w5 = xavier_normal(ks[2], (CHANNEL, C_IN, 5, 5), C_IN * 25, CHANNEL * 25)
    wl = xavier_normal(ks[3], (ENCODE_SIZE, 3 * CHANNEL), 3 * CHANNEL, ENCODE_SIZE)
    return dict(
        board_emb=jnp.eye(BOARD_EMB_DIM, dtype=jnp.float32),          # 'binary'
        pos_emb=jax.random.normal(ks[4], (N_POS, POS_EMB_SIZE), jnp.float32),
        w1=w1, b1=jnp.full((CHANNEL,), 0.01, jnp.float32),
        w3=w3, b3=jnp.full((CHANNEL,), 0.01, jnp.float32),
        w5=w5, b5=jnp.full((CHANNEL,), 0.01, jnp.float32),
        wl=wl, bl=jnp.full((ENCODE_SIZE,), 0.01, jnp.float32),
    )


if __name__ == "__main__":
    key = jax.random.PRNGKey(0)
    k_param, k_board = jax.random.split(key)
    params = init_params(k_param)

    B = 2
    board = jax.random.randint(k_board, (B, 1, BOARD, BOARD), 1, 6)   # values 1..5

    out = cnn_encoder_forward(board, params)
    out = jax.block_until_ready(out)

    ref = jax.block_until_ready(reference_forward(board, params))
    assert out.shape == (B, N_POS, ENCODE_SIZE)
    # Pos contribution + biases are f32-exact and the one-hot patches are exact
    # in bf16; the only quantization is the bf16 conv / linear weights, so the
    # tolerance is tightened vs. the previous revision (5e-2 -> 2e-2).
    assert jnp.allclose(out, ref, atol=2e-2, rtol=2e-2), \
        f"mismatch: max err {jnp.max(jnp.abs(out - ref))}"

    print("KERNEL_OK")
</pallas_src>

<mosaic_0001>
module attributes {stable_mosaic.version = 11 : i64} {
  func.func @cnn_encoder_kernel(%arg0: i32, %arg1: memref<72x128xbf16, #tpu.memory_space<vmem>>, %arg2: memref<128x48xbf16, #tpu.memory_space<vmem>>, %arg3: memref<72x48xf32, #tpu.memory_space<vmem>>, %arg4: memref<48x32xbf16, #tpu.memory_space<vmem>>, %arg5: memref<1x32xf32, #tpu.memory_space<vmem>>, %arg6: memref<72x32xf32, #tpu.memory_space<vmem>>) attributes {dimension_semantics = [#tpu.dimension_semantics<parallel>], iteration_bounds = array<i64: 1>, scalar_prefetch = 0 : i64, scratch_operands = 0 : i64, tpu.core_type = #tpu.core_type<tc>, window_params = [{transform_indices = @transform_0, window_bounds = array<i64: 72, 128>}, {pipeline_mode = #tpu.pipeline_mode<synchronous>, transform_indices = @transform_1, window_bounds = array<i64: 128, 48>}, {pipeline_mode = #tpu.pipeline_mode<synchronous>, transform_indices = @transform_2, window_bounds = array<i64: 72, 48>}, {pipeline_mode = #tpu.pipeline_mode<synchronous>, transform_indices = @transform_3, window_bounds = array<i64: 48, 32>}, {pipeline_mode = #tpu.pipeline_mode<synchronous>, transform_indices = @transform_4, window_bounds = array<i64: 1, 32>}, {transform_indices = @transform_5, window_bounds = array<i64: 72, 32>}]} {
    %c0 = arith.constant 0 : index
    %c0_0 = arith.constant 0 : index
    %0 = vector.load %arg1[%c0, %c0_0] : memref<72x128xbf16, #tpu.memory_space<vmem>>, vector<72x128xbf16>
    %c0_1 = arith.constant 0 : index
    %c0_2 = arith.constant 0 : index
    %1 = vector.load %arg2[%c0_1, %c0_2] : memref<128x48xbf16, #tpu.memory_space<vmem>>, vector<128x48xbf16>
    %cst = arith.constant dense<0.000000e+00> : vector<72x48xf32>
    %2 = tpu.matmul %0, %1, %cst {dimension_numbers = #tpu.dot_dimension_numbers<[1], [0], [0], [1], [0, 0, 1, 1], [], []>} : vector<72x128xbf16>, vector<128x48xbf16>, vector<72x48xf32> -> vector<72x48xf32>
    %c0_3 = arith.constant 0 : index
    %c0_4 = arith.constant 0 : index
    %3 = vector.load %arg3[%c0_3, %c0_4] : memref<72x48xf32, #tpu.memory_space<vmem>>, vector<72x48xf32>
    %4 = arith.addf %2, %3 : vector<72x48xf32>
    %cst_5 = arith.constant 0.000000e+00 : f32
    %5 = vector.broadcast %cst_5 : f32 to vector<72x48xf32>
    %6 = arith.maximumf %4, %5 : vector<72x48xf32>
    %7 = arith.truncf %6 : vector<72x48xf32> to vector<72x48xbf16>
    %c0_6 = arith.constant 0 : index
    %c0_7 = arith.constant 0 : index
    %8 = vector.load %arg4[%c0_6, %c0_7] : memref<48x32xbf16, #tpu.memory_space<vmem>>, vector<48x32xbf16>
    %cst_8 = arith.constant dense<0.000000e+00> : vector<72x32xf32>
    %9 = tpu.matmul %7, %8, %cst_8 {dimension_numbers = #tpu.dot_dimension_numbers<[1], [0], [0], [1], [0, 0, 1, 1], [], []>} : vector<72x48xbf16>, vector<48x32xbf16>, vector<72x32xf32> -> vector<72x32xf32>
    %c0_9 = arith.constant 0 : index
    %c0_10 = arith.constant 0 : index
    %10 = vector.load %arg5[%c0_9, %c0_10] : memref<1x32xf32, #tpu.memory_space<vmem>>, vector<1x32xf32>
    %11 = vector.broadcast %10 : vector<1x32xf32> to vector<72x32xf32>
    %12 = arith.addf %9, %11 : vector<72x32xf32>
    %c0_11 = arith.constant 0 : index
    %c0_12 = arith.constant 0 : index
    %13 = vector.load %arg6[%c0_11, %c0_12] : memref<72x32xf32, #tpu.memory_space<vmem>>, vector<72x32xf32>
    tpu.vector_store %arg6[%c0_11, %c0_12], %12 {strides = array<i32>} : memref<72x32xf32, #tpu.memory_space<vmem>>, vector<72x32xf32>,
    return
  }
  func.func @transform_0(%arg0: i32) -> (i32, i32) {
    %c0_i32 = arith.constant 0 : i32
    %c0_i32_0 = arith.constant 0 : i32
    return %arg0, %c0_i32 : i32, i32
  }
  func.func @transform_1(%arg0: i32) -> (i32, i32) {
    %c0_i32 = arith.constant 0 : i32
    %c0_i32_0 = arith.constant 0 : i32
    %c0_i32_1 = arith.constant 0 : i32
    return %c0_i32, %c0_i32_0 : i32, i32
  }
  func.func @transform_2(%arg0: i32) -> (i32, i32) {
    %c0_i32 = arith.constant 0 : i32
    %c0_i32_0 = arith.constant 0 : i32
    %c0_i32_1 = arith.constant 0 : i32
    return %c0_i32, %c0_i32_0 : i32, i32
  }
  func.func @transform_3(%arg0: i32) -> (i32, i32) {
    %c0_i32 = arith.constant 0 : i32
    %c0_i32_0 = arith.constant 0 : i32
    %c0_i32_1 = arith.constant 0 : i32
    return %c0_i32, %c0_i32_0 : i32, i32
  }
  func.func @transform_4(%arg0: i32) -> (i32, i32) {
    %c0_i32 = arith.constant 0 : i32
    %c0_i32_0 = arith.constant 0 : i32
    %c0_i32_1 = arith.constant 0 : i32
    return %c0_i32, %c0_i32_0 : i32, i32
  }
  func.func @transform_5(%arg0: i32) -> (i32, i32) {
    %c0_i32 = arith.constant 0 : i32
    %c0_i32_0 = arith.constant 0 : i32
    return %arg0, %c0_i32 : i32, i32
  }
}

</mosaic_0001>

<llo_original>
// kernel: tpu_custom_call.1
$region0: #{tpu_custom_call.1}
  #allocation0 [shape = 'u32[]', space=smem, size = 0x4, offset = 0x4, fixed_abs, tag = 'smem constant byte address 0x4 - core index']
  #allocation1 [shape = 'u32[144,128]{1,0:T(1,128)}', space=vmem, size = 0x12000, scoped, tag = 'internal scratch']
  %s0 = inlined_call_operand.vmem [shape: bf16[72,128], index: 0, kind: input, shape index: {}]
  %s1 = inlined_call_operand.vmem [shape: bf16[128,48], index: 1, kind: input, shape index: {}]
  %s2 = inlined_call_operand.vmem [shape: f32[72,48], index: 2, kind: input, shape index: {}]
  %s3 = inlined_call_operand.vmem [shape: bf16[48,32], index: 3, kind: input, shape index: {}]
  %s4 = inlined_call_operand.vmem [shape: f32[1,32], index: 4, kind: input, shape index: {}]
  %s5 = inlined_call_operand.vmem [shape: f32[72,32], index: 5, kind: output, shape index: {}]
  %s6 = sld [smem:[#allocation0]]
  $region30: #{tpu_custom_call.1} parent=0
    _
  %s8 = ssub.s32 1, %s6
  %s9 = scalar_select 0, %s8, %s6
  // Predicated region
  $region2: #{tpu_custom_call.1} parent=0 // pred_check
    _
  $region3: #{tpu_custom_call.1} parent=0 // pred_check_branch
    %11 = sbr.rel (0) target = $region5
  $region4: #{tpu_custom_call.1} parent=0 // pred_region
    _
  $region5: #{tpu_custom_call.1} parent=0 // pred_fallthru
    _
  // Predicated region
  $region6: #{tpu_custom_call.1} parent=0 // pred_check
    _
  $region7: #{tpu_custom_call.1} parent=0 // pred_check_branch
    %13 = sbr.rel (0) target = $region9
  $region8: #{tpu_custom_call.1} parent=0 // pred_region
    _
  $region9: #{tpu_custom_call.1} parent=0 // pred_fallthru
    _
  // Predicated region
  $region10: #{tpu_custom_call.1} parent=0 // pred_check
    _
  $region11: #{tpu_custom_call.1} parent=0 // pred_check_branch
    %15 = sbr.rel (0) target = $region13
  $region12: #{tpu_custom_call.1} parent=0 // pred_region
    _
  $region13: #{tpu_custom_call.1} parent=0 // pred_fallthru
    _
  // Predicated region
  $region14: #{tpu_custom_call.1} parent=0 // pred_check
    _
  $region15: #{tpu_custom_call.1} parent=0 // pred_check_branch
    %17 = sbr.rel (0) target = $region17
  $region16: #{tpu_custom_call.1} parent=0 // pred_region
    _
  $region17: #{tpu_custom_call.1} parent=0 // pred_fallthru
    _
  // Predicated region
  $region18: #{tpu_custom_call.1} parent=0 // pred_check
    _
  $region19: #{tpu_custom_call.1} parent=0 // pred_check_branch
    %19 = sbr.rel (0) target = $region21
  $region20: #{tpu_custom_call.1} parent=0 // pred_region
    _
  $region21: #{tpu_custom_call.1} parent=0 // pred_fallthru
    _
  %v21 = vld [vmem:[%s0] sm:$0xf]
  %v22 = vld [vmem:[%s0 + $0x4] sm:$0xf]
  %v23 = vld [vmem:[%s0 + $0x8] sm:$0xf]
  %v24 = vld [vmem:[%s0 + $0xc] sm:$0xf]
  %v25 = vld [vmem:[%s0 + $0x10] sm:$0xf]
  %v26 = vld [vmem:[%s0 + $0x14] sm:$0xf]
  %v27 = vld [vmem:[%s0 + $0x18] sm:$0xf]
  %v28 = vld [vmem:[%s0 + $0x1c] sm:$0xf]
  %v29 = vld [vmem:[%s0 + $0x20] sm:$0xf]
  %v30 = vld [vmem:[%s1] sm:$0xf]
  %v31 = vld [vmem:[%s1 + $0x4] sm:$0xf]
  %v32 = vld [vmem:[%s1 + $0x8] sm:$0xf]
  %v33 = vld [vmem:[%s1 + $0xc] sm:$0xf]
  %v34 = vld [vmem:[%s1 + $0x10] sm:$0xf]
  %v35 = vld [vmem:[%s1 + $0x14] sm:$0xf]
  %v36 = vld [vmem:[%s1 + $0x18] sm:$0xf]
  %v37 = vld [vmem:[%s1 + $0x1c] sm:$0xf]
  %v38 = vld [vmem:[%s1 + $0x20] sm:$0xf]
  %v39 = vld [vmem:[%s1 + $0x24] sm:$0xf]
  %v40 = vld [vmem:[%s1 + $0x28] sm:$0xf]
  %v41 = vld [vmem:[%s1 + $0x2c] sm:$0xf]
  %v42 = vld [vmem:[%s1 + $0x30] sm:$0xf]
  %v43 = vld [vmem:[%s1 + $0x34] sm:$0xf]
  %v44 = vld [vmem:[%s1 + $0x38] sm:$0xf]
  %v45 = vld [vmem:[%s1 + $0x3c] sm:$0xf]
  %v46 = vld [vmem:[%s2] sm:$0xff]
  %v47 = vld [vmem:[%s2 + $0x8] sm:$0xff]
  %v48 = vld [vmem:[%s2 + $0x10] sm:$0xff]
  %v49 = vld [vmem:[%s2 + $0x18] sm:$0xff]
  %v50 = vld [vmem:[%s2 + $0x20] sm:$0xff]
  %v51 = vld [vmem:[%s2 + $0x28] sm:$0xff]
  %v52 = vld [vmem:[%s2 + $0x30] sm:$0xff]
  %v53 = vld [vmem:[%s2 + $0x38] sm:$0xff]
  %v54 = vld [vmem:[%s2 + $0x40] sm:$0xff]
  %v64 = vunpack.c.l.b16 %v21
  %v65 = vunpack.c.l.b16 %v22
  %v66 = vunpack.c.l.b16 %v23
  %v67 = vunpack.c.l.b16 %v24
  %v68 = vunpack.c.l.b16 %v25
  %v69 = vunpack.c.l.b16 %v26
  %v70 = vunpack.c.l.b16 %v27
  %v71 = vunpack.c.l.b16 %v28
  %v72 = vunpack.c.l.b16 %v29
  %v73 = vpack.c.b16 %v65, %v64
  %v74 = vpack.c.b16 %v67, %v66
  %v75 = vpack.c.b16 %v69, %v68
  %v76 = vpack.c.b16 %v71, %v70
  %v77 = vpack.c.b16 %v72, %v72
  %v99 = vunpack.c.l.b16 %v30
  %v100 = vunpack.c.l.b16 %v31
  %v101 = vunpack.c.l.b16 %v32
  %v102 = vunpack.c.l.b16 %v33
  %v103 = vunpack.c.l.b16 %v34
  %v104 = vunpack.c.l.b16 %v35
  %v105 = vunpack.c.l.b16 %v36
  %v106 = vunpack.c.l.b16 %v37
  %v107 = vunpack.c.l.b16 %v38
  %v108 = vunpack.c.l.b16 %v39
  %v109 = vunpack.c.l.b16 %v40
  %v110 = vunpack.c.l.b16 %v41
  %v111 = vunpack.c.l.b16 %v42
  %v112 = vunpack.c.l.b16 %v43
  %v113 = vunpack.c.l.b16 %v44
  %v114 = vunpack.c.l.b16 %v45
  %v115 = vpack.c.b16 %v100, %v99
  %v116 = vpack.c.b16 %v102, %v101
  %v117 = vpack.c.b16 %v104, %v103
  %v118 = vpack.c.b16 %v106, %v105
  %v119 = vpack.c.b16 %v108, %v107
  %v120 = vpack.c.b16 %v110, %v109
  %v121 = vpack.c.b16 %v112, %v111
  %v122 = vpack.c.b16 %v114, %v113
  %131 = vmatprep.subr.bf16.mxu0 0
  %132 = vmatpush1.bf16.msra.mxu0 %v122
  %133 = vmatprep.subr.bf16.mxu0 0
  %134 = vmatpush1.bf16.msra.mxu0 %v121
  %135 = vmatprep.subr.bf16.mxu0 0
  %136 = vmatpush1.bf16.msra.mxu0 %v120
  %137 = vmatprep.subr.bf16.mxu0 0
  %138 = vmatpush1.bf16.msra.mxu0 %v119
  %139 = vmatprep.subr.bf16.mxu0 0
  %140 = vmatpush1.bf16.msra.mxu0 %v118
  %141 = vmatprep.subr.bf16.mxu0 0
  %142 = vmatpush1.bf16.msra.mxu0 %v117
  %143 = vmatprep.subr.bf16.mxu0 0
  %144 = vmatpush1.bf16.msra.mxu0 %v116
  %145 = vmatprep.subr.bf16.mxu0 0
  %146 = vmatpush1.bf16.msra.mxu0 %v115
  %147 = vmatprep.subr.bf16.mxu0 0
  %148 = vmatpush2.bf16.msra.mxu0 0
  %149 = vmatprep.subr.bf16.mxu0 0
  %150 = vmatpush2.bf16.msra.mxu0 0
  %151 = vmatprep.subr.bf16.mxu0 0
  %152 = vmatpush2.bf16.msra.mxu0 0
  %153 = vmatprep.subr.bf16.mxu0 0
  %154 = vmatpush2.bf16.msra.mxu0 0
  %155 = vmatprep.subr.bf16.mxu0 0
  %156 = vmatpush2.bf16.msra.mxu0 0
  %157 = vmatprep.subr.bf16.mxu0 0
  %158 = vmatpush2.bf16.msra.mxu0 0
  %159 = vmatprep.subr.bf16.mxu0 0
  %160 = vmatpush2.bf16.msra.mxu0 0
  %161 = vmatprep.subr.bf16.mxu0 0
  %162 = vmatpush2.bf16.msra.mxu0 0
  %163 = vmatprep.mubr.bf16.mxu0 0
  %164 = vmatmul.mubr.bf16.gmra.mxu0 %v73
  %v165 = vpop.f32.mrf.mxu0
  %v166 = vadd.f32 %v46, %v165
  %v167 = vpop.f32.mrf.mxu0
  %v168 = vpop.f32.mrf.mxu0
  %v169 = vadd.f32 %v47, %v168
  %v170 = vpop.f32.mrf.mxu0
  %171 = vmatprep.mubr.bf16.mxu0 0
  %172 = vmatmul.mubr.bf16.gmra.mxu0 %v74
  %v173 = vpop.f32.mrf.mxu0
  %v174 = vadd.f32 %v48, %v173
  %v175 = vpop.f32.mrf.mxu0
  %v176 = vpop.f32.mrf.mxu0
  %v177 = vadd.f32 %v49, %v176
  %v178 = vpop.f32.mrf.mxu0
  %179 = vmatprep.mubr.bf16.mxu0 0
  %180 = vmatmul.mubr.bf16.gmra.mxu0 %v75
  %v181 = vpop.f32.mrf.mxu0
  %v182 = vadd.f32 %v50, %v181
  %v183 = vpop.f32.mrf.mxu0
  %v184 = vpop.f32.mrf.mxu0
  %v185 = vadd.f32 %v51, %v184
  %v186 = vpop.f32.mrf.mxu0
  %187 = vmatprep.mubr.bf16.mxu0 0
  %188 = vmatmul.mubr.bf16.gmra.mxu0 %v76
  %v189 = vpop.f32.mrf.mxu0
  %v190 = vadd.f32 %v52, %v189
  %v191 = vpop.f32.mrf.mxu0
  %v192 = vpop.f32.mrf.mxu0
  %v193 = vadd.f32 %v53, %v192
  %v194 = vpop.f32.mrf.mxu0
  %195 = vmatprep.mubr.bf16.mxu0 0
  %196 = vmatmul.mubr.bf16.gmra.mxu0 %v77
  %v197 = vpop.f32.mrf.mxu0
  %v198 = vadd.f32 %v54, %v197
  %v199 = vpop.f32.mrf.mxu0
  %v200 = vpop.f32.mrf.mxu0
  %v201 = vpop.f32.mrf.mxu0
  %202 = vdwg.mxu0
  %v203 = vmax.f32 %v166, 0.0
  %v204 = vmax.f32 %v169, 0.0
  %v205 = vmax.f32 %v174, 0.0
  %v206 = vmax.f32 %v177, 0.0
  %v207 = vmax.f32 %v182, 0.0
  %v208 = vmax.f32 %v185, 0.0
  %v209 = vmax.f32 %v190, 0.0
  %v210 = vmax.f32 %v193, 0.0
  %v211 = vmax.f32 %v198, 0.0
  %v212 = vpack.c.bf16 %v204, %v203
  %v213 = vpack.c.bf16 %v206, %v205
  %v214 = vpack.c.bf16 %v208, %v207
  %v215 = vpack.c.bf16 %v210, %v209
  %v216 = vpack.c.bf16 %v211, %v211
  %v217 = vld [vmem:[%s3] sm:$0xf]
  %v218 = vld [vmem:[%s3 + $0x4] sm:$0xf]
  %v219 = vld [vmem:[%s3 + $0x8] sm:$0xf]
  %v220 = vld [vmem:[%s3 + $0xc] sm:$0xf]
  %v221 = vld [vmem:[%s3 + $0x10] sm:$0xf]
  %v222 = vld [vmem:[%s3 + $0x14] sm:$0xf]
  %v223 = vld [vmem:[%s4] sm:$0x1]
  %v225 = vlaneseq
  %v226 = vshrl.u32 %v225, 7
  %v227 = vsub.s32 0, %v226
  %v228 = vrot.slane %v223, %v227
  %v236 = vunpack.c.l.b16 %v217
  %v237 = vunpack.c.l.b16 %v218
  %v238 = vunpack.c.l.b16 %v219
  %v239 = vunpack.c.l.b16 %v220
  %v240 = vunpack.c.l.b16 %v221
  %v241 = vunpack.c.l.b16 %v222
  %v242 = vpack.c.b16 %v237, %v236
  %v243 = vpack.c.b16 %v239, %v238
  %v244 = vpack.c.b16 %v241, %v240
  %vm248 = vcmask 392192
  %v250 = vsel %vm248, %v212, 0
  %v253 = vsel %vm248, %v213, 0
  %v256 = vsel %vm248, %v214, 0
  %v259 = vsel %vm248, %v215, 0
  %v262 = vsel %vm248, %v216, 0
  %264 = vmatprep.subr.bf16.mxu0 0
  %265 = vmatpush1.bf16.msra.mxu0 0
  %266 = vmatprep.subr.bf16.mxu0 0
  %267 = vmatpush1.bf16.msra.mxu0 0
  %268 = vmatprep.subr.bf16.mxu0 0
  %269 = vmatpush1.bf16.msra.mxu0 0
  %270 = vmatprep.subr.bf16.mxu0 0
  %271 = vmatpush1.bf16.msra.mxu0 0
  %272 = vmatprep.subr.bf16.mxu0 0
  %273 = vmatpush1.bf16.msra.mxu0 0
  %274 = vmatprep.subr.bf16.mxu0 0
  %275 = vmatpush1.bf16.msra.mxu0 %v244
  %276 = vmatprep.subr.bf16.mxu0 0
  %277 = vmatpush1.bf16.msra.mxu0 %v243
  %278 = vmatprep.subr.bf16.mxu0 0
  %279 = vmatpush1.bf16.msra.mxu0 %v242
  %280 = vmatprep.subr.bf16.mxu0 0
  %281 = vmatpush2.bf16.msra.mxu0 0
  %282 = vmatprep.subr.bf16.mxu0 0
  %283 = vmatpush2.bf16.msra.mxu0 0
  %284 = vmatprep.subr.bf16.mxu0 0
  %285 = vmatpush2.bf16.msra.mxu0 0
  %286 = vmatprep.subr.bf16.mxu0 0
  %287 = vmatpush2.bf16.msra.mxu0 0
  %288 = vmatprep.subr.bf16.mxu0 0
  %289 = vmatpush2.bf16.msra.mxu0 0
  %290 = vmatprep.subr.bf16.mxu0 0
  %291 = vmatpush2.bf16.msra.mxu0 0
  %292 = vmatprep.subr.bf16.mxu0 0
  %293 = vmatpush2.bf16.msra.mxu0 0
  %294 = vmatprep.subr.bf16.mxu0 0
  %295 = vmatpush2.bf16.msra.mxu0 0
  %296 = vmatprep.mubr.bf16.mxu0 0
  %297 = vmatmul.mubr.bf16.gmra.mxu0 %v250
  %v298 = vpop.f32.mrf.mxu0
  %v299 = vadd.f32 %v228, %v298
  %v300 = vpop.f32.mrf.mxu0
  %v301 = vpop.f32.mrf.mxu0
  %v302 = vadd.f32 %v228, %v301
  %v303 = vpop.f32.mrf.mxu0
  %304 = vmatprep.mubr.bf16.mxu0 0
  %305 = vmatmul.mubr.bf16.gmra.mxu0 %v253
  %v306 = vpop.f32.mrf.mxu0
  %v307 = vadd.f32 %v228, %v306
  %v308 = vpop.f32.mrf.mxu0
  %v309 = vpop.f32.mrf.mxu0
  %v310 = vadd.f32 %v228, %v309
  %v311 = vpop.f32.mrf.mxu0
  %312 = vmatprep.mubr.bf16.mxu0 0
  %313 = vmatmul.mubr.bf16.gmra.mxu0 %v256
  %v314 = vpop.f32.mrf.mxu0
  %v315 = vadd.f32 %v228, %v314
  %v316 = vpop.f32.mrf.mxu0
  %v317 = vpop.f32.mrf.mxu0
  %v318 = vadd.f32 %v228, %v317
  %v319 = vpop.f32.mrf.mxu0
  %320 = vmatprep.mubr.bf16.mxu0 0
  %321 = vmatmul.mubr.bf16.gmra.mxu0 %v259
  %v322 = vpop.f32.mrf.mxu0
  %v323 = vadd.f32 %v228, %v322
  %v324 = vpop.f32.mrf.mxu0
  %v325 = vpop.f32.mrf.mxu0
  %v326 = vadd.f32 %v228, %v325
  %v327 = vpop.f32.mrf.mxu0
  %328 = vmatprep.mubr.bf16.mxu0 0
  %329 = vmatmul.mubr.bf16.gmra.mxu0 %v262
  %v330 = vpop.f32.mrf.mxu0
  %v331 = vadd.f32 %v228, %v330
  %v332 = vpop.f32.mrf.mxu0
  %v333 = vpop.f32.mrf.mxu0
  %v334 = vpop.f32.mrf.mxu0
  %335 = vdwg.mxu0
  %vm336 = vcmask 261120
  %337 = vst.msk [vmem:[%s5] sm:$0xff] %vm336, %v299
  %338 = vst.msk [vmem:[%s5 + $0x8] sm:$0xff] %vm336, %v302
  %339 = vst.msk [vmem:[%s5 + $0x10] sm:$0xff] %vm336, %v307
  %340 = vst.msk [vmem:[%s5 + $0x18] sm:$0xff] %vm336, %v310
  %341 = vst.msk [vmem:[%s5 + $0x20] sm:$0xff] %vm336, %v315
  %342 = vst.msk [vmem:[%s5 + $0x28] sm:$0xff] %vm336, %v318
  %343 = vst.msk [vmem:[%s5 + $0x30] sm:$0xff] %vm336, %v323
  %344 = vst.msk [vmem:[%s5 + $0x38] sm:$0xff] %vm336, %v326
  %345 = vst.msk [vmem:[%s5 + $0x40] sm:$0xff] %vm336, %v331
  // Predicated region
  $region22: #{tpu_custom_call.1} parent=0 // pred_check
    _
  $region23: #{tpu_custom_call.1} parent=0 // pred_check_branch
    %347 = sbr.rel (0) target = $region25
  $region24: #{tpu_custom_call.1} parent=0 // pred_region
    _
  $region25: #{tpu_custom_call.1} parent=0 // pred_fallthru
    _
  // Predicated region
  $region26: #{tpu_custom_call.1} parent=0 // pred_check
    _
  $region27: #{tpu_custom_call.1} parent=0 // pred_check_branch
    %349 = sbr.rel (0) target = $region29
  $region28: #{tpu_custom_call.1} parent=0 // pred_region
    _
  $region29: #{tpu_custom_call.1} parent=0 // pred_fallthru
    _

</llo_original>
